<compile_context>
chip_gen: v6e
topology: v6e:2x2x1
jax: 0.10.0
libtpu: 0.0.40
codegen_flags: <defaults>
</compile_context>

<pallas_src>
import math
from functools import partial

import jax
import jax.numpy as jnp
from jax.experimental import pallas as pl
from jax.experimental.pallas import tpu as pltpu

_EPS = 1e-12            # torch.nn.functional.normalize default eps
_EPS_SQ = _EPS * _EPS   # 1 / max(sqrt(s), eps) == rsqrt(max(s, eps**2))


def _ceil_to(x, m):
    return ((x + m - 1) // m) * m


def _vmem_capacity_bytes():
    """Per-core VMEM capacity; conservative (v7x) fallback if unqueryable."""
    try:
        cap = int(pltpu.get_tpu_info().vmem_capacity_bytes)
        if cap > 0:
            return cap
    except Exception:
        pass
    return 64 << 20


# --------------------------------------------------------------------------
# Single-pass kernel: whole B axis resident, tile only the lane (N) axis.
# --------------------------------------------------------------------------
def _cnormsq_kernel(xr_ref, xi_ref, out_ref):
    # xr_ref / xi_ref: (B, tn) f32 ; out_ref: (2, B, tn) f32
    xr = xr_ref[...]
    xi = xi_ref[...]
    # Per-column L2 over the B axis (== dim=1 of the stacked tensor); one
    # rsqrt per (1, tn) row, broadcast-multiplied (B x fewer EUP ops).
    inv_r = jax.lax.rsqrt(
        jnp.maximum(jnp.sum(xr * xr, axis=0, keepdims=True), _EPS_SQ))
    inv_i = jax.lax.rsqrt(
        jnp.maximum(jnp.sum(xi * xi, axis=0, keepdims=True), _EPS_SQ))
    out_ref[0] = xr * inv_r
    out_ref[1] = xi * inv_i


def _single_pass_tiling(B, N, target_plane_bytes):
    """Pick (tn, grid) for the lane axis; last block may be partial."""
    if N <= 128:
        return N, 1
    n128 = pl.cdiv(N, 128)  # max useful number of grid steps
    # Columns per tile so one sublane-padded input plane block is ~target.
    lanes_cap = max(1, (target_plane_bytes // (4 * _ceil_to(B, 8))) // 128)
    grid = pl.cdiv(n128, lanes_cap)
    # Prefer >= 4 steps: cuts exposed DMA head/tail and gives v7x's two
    # TensorCores pipelinable work each.
    if grid < 4:
        grid = min(4, n128)
    chunks = pl.cdiv(n128, grid)
    grid = pl.cdiv(n128, chunks)
    # Prefer an even step count so the single "parallel" axis splits evenly
    # across v7x's two TensorCores.
    if grid % 2 == 1 and chunks > 1:
        alt_chunks = chunks - 1
        alt_grid = pl.cdiv(n128, alt_chunks)
        if alt_grid % 2 == 0:
            chunks, grid = alt_chunks, alt_grid
    return chunks * 128, grid


# --------------------------------------------------------------------------
# Two-pass fallback for very large B (B axis tiled).
# --------------------------------------------------------------------------
def _sumsq_kernel(xr_ref, xi_ref, ssq_ref, *, total_b, tile_b):
    # xr_ref / xi_ref: (tb, tn) ; ssq_ref: (2, 1, tn) accumulator (resident
    # across the trailing "arbitrary" B grid axis).
    b = pl.program_id(1)

    @pl.when(b == 0)
    def _():
        ssq_ref[...] = jnp.zeros_like(ssq_ref)

    xr = xr_ref[...]
    xi = xi_ref[...]
    if total_b % tile_b != 0:
        # Mask garbage rows of the partial last B tile out of the reduction.
        rows = jax.lax.broadcasted_iota(jnp.int32, xr.shape, 0) + b * tile_b
        valid = rows < total_b
        xr = jnp.where(valid, xr, 0.0)
        xi = jnp.where(valid, xi, 0.0)
    ssq_ref[0] = ssq_ref[0] + jnp.sum(xr * xr, axis=0, keepdims=True)
    ssq_ref[1] = ssq_ref[1] + jnp.sum(xi * xi, axis=0, keepdims=True)


def _scale_kernel(ssq_ref, xr_ref, xi_ref, out_ref):
    # ssq_ref: (2, 1, tn) ; xr/xi: (tb, tn) ; out: (2, tb, tn)
    inv_r = jax.lax.rsqrt(jnp.maximum(ssq_ref[0], _EPS_SQ))
    inv_i = jax.lax.rsqrt(jnp.maximum(ssq_ref[1], _EPS_SQ))
    out_ref[0] = xr_ref[...] * inv_r
    out_ref[1] = xi_ref[...] * inv_i


def _two_pass_tiling(B, N, target_plane_bytes):
    tb_target = max(8, (target_plane_bytes // (4 * 128)) // 8 * 8)
    tb = B if B <= tb_target else tb_target          # multiple of 8, or full B
    nb = pl.cdiv(B, tb)
    if N <= 128:
        tn = N
    else:
        chunks = max(1, (target_plane_bytes // (4 * max(_ceil_to(tb, 8), 8))) // 128)
        tn = min(chunks, pl.cdiv(N, 128)) * 128
    nn = pl.cdiv(N, tn)
    return tb, nb, tn, nn


# --------------------------------------------------------------------------
# Wrapper
# --------------------------------------------------------------------------
def cnormsq(x, normed=True, *, force_two_pass=False):
    """Pallas implementation of CNormSq.forward for a complex input x.

    x: complex array of shape (B, ...). Returns float32 array (2, B, ...).
    """
    assert jnp.iscomplexobj(x), "CNormSq expects a complex input"
    shape = x.shape
    B = int(shape[0])
    N = int(math.prod(shape[1:])) if len(shape) > 1 else 1

    # Lane-dense (B, N) slabs.  With allow_input_fusion the real/imag
    # extraction + (free, contiguous) reshape fuse into the kernel's input
    # fetch instead of materializing an extra HBM round trip.
    xr = jnp.real(x).astype(jnp.float32).reshape(B, N)
    xi = jnp.imag(x).astype(jnp.float32).reshape(B, N)

    if not normed:
        # Pure complexor: a plain stack.  Letting XLA handle this copy avoids
        # a custom-call fusion barrier with zero upside.
        return jnp.stack((xr, xi), axis=0).reshape((2,) + shape)

    capacity = _vmem_capacity_bytes()
    # ~1 MiB per input-plane block on <=64 MiB-VMEM parts (v7x), ~4 MiB on
    # 128 MiB parts (v5e/v6e).  Resident set = 2 buffers * (2 input planes +
    # 2 output planes) * sublane-padded plane block = 8x plane block.
    target_plane_bytes = (1 << 20) if capacity <= (64 << 20) else (4 << 20)
    vmem_limit = int(max(32 << 20, min(capacity * 6 // 10, 64 << 20)))

    b_pad = _ceil_to(B, 8)
    # Double-buffered resident bytes at the minimum tn=128 tile.
    min_resident = 2 * (2 + 2) * b_pad * 128 * 4

    if (not force_two_pass) and min_resident <= vmem_limit:
        tn, grid = _single_pass_tiling(B, N, target_plane_bytes)
        out = pl.pallas_call(
            _cnormsq_kernel,
            out_shape=jax.ShapeDtypeStruct((2, B, N), jnp.float32),
            grid=(grid,),
            in_specs=[
                pl.BlockSpec((B, tn), lambda j: (0, j)),
                pl.BlockSpec((B, tn), lambda j: (0, j)),
            ],
            out_specs=pl.BlockSpec((2, B, tn), lambda j: (0, 0, j)),
            compiler_params=pltpu.CompilerParams(
                dimension_semantics=("parallel",),
                allow_input_fusion=[True, True],
                vmem_limit_bytes=vmem_limit,
            ),
        )(xr, xi)
        return out.reshape((2,) + shape)

    # ---- large-B fallback: two passes (sum-of-squares, then scale) --------
    tb, nb, tn, nn = _two_pass_tiling(B, N, target_plane_bytes)

    ssq = pl.pallas_call(
        partial(_sumsq_kernel, total_b=B, tile_b=tb),
        out_shape=jax.ShapeDtypeStruct((2, 1, N), jnp.float32),
        grid=(nn, nb),  # reduction (B) axis last
        in_specs=[
            pl.BlockSpec((tb, tn), lambda j, b: (b, j)),
            pl.BlockSpec((tb, tn), lambda j, b: (b, j)),
        ],
        out_specs=pl.BlockSpec((2, 1, tn), lambda j, b: (0, 0, j)),
        compiler_params=pltpu.CompilerParams(
            dimension_semantics=("parallel", "arbitrary"),
            allow_input_fusion=[True, True],
            vmem_limit_bytes=vmem_limit,
        ),
    )(xr, xi)

    out = pl.pallas_call(
        _scale_kernel,
        out_shape=jax.ShapeDtypeStruct((2, B, N), jnp.float32),
        grid=(nn, nb),
        in_specs=[
            pl.BlockSpec((2, 1, tn), lambda j, b: (0, 0, j)),
            pl.BlockSpec((tb, tn), lambda j, b: (b, j)),
            pl.BlockSpec((tb, tn), lambda j, b: (b, j)),
        ],
        out_specs=pl.BlockSpec((2, tb, tn), lambda j, b: (0, b, j)),
        compiler_params=pltpu.CompilerParams(
            dimension_semantics=("parallel", "parallel"),
            allow_input_fusion=[False, True, True],
            vmem_limit_bytes=vmem_limit,
        ),
    )(ssq, xr, xi)
    return out.reshape((2,) + shape)


if __name__ == "__main__":
    k0, k1, k2, k3 = jax.random.split(jax.random.PRNGKey(0), 4)

    def ref_normed(xc):
        stacked = jnp.stack((jnp.real(xc), jnp.imag(xc)), axis=0).astype(jnp.float32)
        denom = jnp.maximum(
            jnp.sqrt(jnp.sum(stacked * stacked, axis=1, keepdims=True)), _EPS)
        return stacked / denom

    B, C, H, W = 2, 4, 16, 16
    x = (jax.random.normal(k0, (B, C, H, W), dtype=jnp.float32)
         + 1j * jax.random.normal(k1, (B, C, H, W), dtype=jnp.float32))

    # Single-pass path.
    out = jax.block_until_ready(cnormsq(x, normed=True))
    ref = ref_normed(x)
    assert out.shape == (2, B, C, H, W)
    assert out.dtype == jnp.float32
    assert jnp.allclose(out, ref, atol=1e-5, rtol=1e-5)

    # Ragged lane edge (N not a multiple of the tile): exercises the
    # no-pad / masked-partial-last-block path.
    x2 = (jax.random.normal(k2, (2, 5, 12, 16), dtype=jnp.float32)
          + 1j * jax.random.normal(k3, (2, 5, 12, 16), dtype=jnp.float32))
    out2 = jax.block_until_ready(cnormsq(x2, normed=True))
    assert jnp.allclose(out2, ref_normed(x2), atol=1e-5, rtol=1e-5)

    # Large-B fallback path, forced on the small shape for coverage.
    out3 = jax.block_until_ready(cnormsq(x, normed=True, force_two_pass=True))
    assert jnp.allclose(out3, ref, atol=1e-5, rtol=1e-5)

    # normed=False (pure complexor) path.
    out_plain = jax.block_until_ready(cnormsq(x, normed=False))
    stacked = jnp.stack((jnp.real(x), jnp.imag(x)), axis=0)
    assert jnp.allclose(out_plain, stacked, atol=1e-6)

    print("KERNEL_OK")
</pallas_src>

<mosaic_0001>
module attributes {stable_mosaic.version = 11 : i64} {
  func.func @_cnormsq_kernel(%arg0: i32, %arg1: memref<2x256xf32, #tpu.memory_space<vmem>>, %arg2: memref<2x256xf32, #tpu.memory_space<vmem>>, %arg3: memref<2x2x256xf32, #tpu.memory_space<vmem>>) attributes {dimension_semantics = [#tpu.dimension_semantics<parallel>], iteration_bounds = array<i64: 4>, scalar_prefetch = 0 : i64, scratch_operands = 0 : i64, tpu.core_type = #tpu.core_type<tc>, window_params = [{transform_indices = @transform_0, window_bounds = array<i64: 2, 256>}, {transform_indices = @transform_1, window_bounds = array<i64: 2, 256>}, {transform_indices = @transform_2, window_bounds = array<i64: 2, 2, 256>}]} {
    %c0 = arith.constant 0 : index
    %c0_0 = arith.constant 0 : index
    %0 = vector.load %arg1[%c0, %c0_0] : memref<2x256xf32, #tpu.memory_space<vmem>>, vector<2x256xf32>
    %c0_1 = arith.constant 0 : index
    %c0_2 = arith.constant 0 : index
    %1 = vector.load %arg2[%c0_1, %c0_2] : memref<2x256xf32, #tpu.memory_space<vmem>>, vector<2x256xf32>
    %2 = arith.mulf %0, %0 : vector<2x256xf32>
    %cst = arith.constant dense<0.000000e+00> : vector<256xf32>
    %3 = vector.multi_reduction <add>, %2, %cst [0] : vector<2x256xf32> to vector<256xf32>
    %4 = vector.shape_cast %3 : vector<256xf32> to vector<1x256xf32>
    %cst_3 = arith.constant 1.000000e-24 : f32
    %5 = vector.broadcast %cst_3 : f32 to vector<1x256xf32>
    %6 = arith.maximumf %4, %5 : vector<1x256xf32>
    %7 = math.rsqrt %6 : vector<1x256xf32>
    %8 = arith.mulf %1, %1 : vector<2x256xf32>
    %cst_4 = arith.constant dense<0.000000e+00> : vector<256xf32>
    %9 = vector.multi_reduction <add>, %8, %cst_4 [0] : vector<2x256xf32> to vector<256xf32>
    %10 = vector.shape_cast %9 : vector<256xf32> to vector<1x256xf32>
    %cst_5 = arith.constant 1.000000e-24 : f32
    %11 = vector.broadcast %cst_5 : f32 to vector<1x256xf32>
    %12 = arith.maximumf %10, %11 : vector<1x256xf32>
    %13 = math.rsqrt %12 : vector<1x256xf32>
    %14 = vector.broadcast %7 : vector<1x256xf32> to vector<2x256xf32>
    %15 = arith.mulf %0, %14 : vector<2x256xf32>
    %c0_6 = arith.constant 0 : index
    %c0_7 = arith.constant 0 : index
    %c0_8 = arith.constant 0 : index
    %16 = vector.load %arg3[%c0_6, %c0_7, %c0_8] : memref<2x2x256xf32, #tpu.memory_space<vmem>>, vector<1x2x256xf32>
    %17 = vector.shape_cast %16 : vector<1x2x256xf32> to vector<2x256xf32>
    %18 = vector.shape_cast %15 : vector<2x256xf32> to vector<1x2x256xf32>
    tpu.vector_store %arg3[%c0_6, %c0_7, %c0_8], %18 {strides = array<i32>} : memref<2x2x256xf32, #tpu.memory_space<vmem>>, vector<1x2x256xf32>,
    %19 = vector.broadcast %13 : vector<1x256xf32> to vector<2x256xf32>
    %20 = arith.mulf %1, %19 : vector<2x256xf32>
    %c1 = arith.constant 1 : index
    %c0_9 = arith.constant 0 : index
    %c0_10 = arith.constant 0 : index
    %21 = vector.load %arg3[%c1, %c0_9, %c0_10] : memref<2x2x256xf32, #tpu.memory_space<vmem>>, vector<1x2x256xf32>
    %22 = vector.shape_cast %21 : vector<1x2x256xf32> to vector<2x256xf32>
    %23 = vector.shape_cast %20 : vector<2x256xf32> to vector<1x2x256xf32>
    tpu.vector_store %arg3[%c1, %c0_9, %c0_10], %23 {strides = array<i32>} : memref<2x2x256xf32, #tpu.memory_space<vmem>>, vector<1x2x256xf32>,
    return
  }
  func.func @transform_0(%arg0: i32) -> (i32, i32) {
    %c0_i32 = arith.constant 0 : i32
    %c0_i32_0 = arith.constant 0 : i32
    return %c0_i32, %arg0 : i32, i32
  }
  func.func @transform_1(%arg0: i32) -> (i32, i32) {
    %c0_i32 = arith.constant 0 : i32
    %c0_i32_0 = arith.constant 0 : i32
    return %c0_i32, %arg0 : i32, i32
  }
  func.func @transform_2(%arg0: i32) -> (i32, i32, i32) {
    %c0_i32 = arith.constant 0 : i32
    %c0_i32_0 = arith.constant 0 : i32
    %c0_i32_1 = arith.constant 0 : i32
    return %c0_i32, %c0_i32_0, %arg0 : i32, i32, i32
  }
}

</mosaic_0001>

<llo_original>
// kernel: tpu_custom_call.1
$region0: #{tpu_custom_call.1}
  #allocation0 [shape = 'u32[]', space=smem, size = 0x4, offset = 0x4, fixed_abs, tag = 'smem constant byte address 0x4 - core index']
  #allocation1 [shape = 'u32[144,128]{1,0:T(1,128)}', space=vmem, size = 0x12000, scoped, tag = 'internal scratch']
  %s0 = inlined_call_operand.hbm [shape: f32[2,1024], index: 0, kind: input, shape index: {}]
  %s1 = inlined_call_operand.hbm [shape: f32[2,1024], index: 1, kind: input, shape index: {}]
  %s2 = inlined_call_operand.hbm [shape: f32[2,2,1024], index: 2, kind: output, shape index: {}]
  %s3 = sld [smem:[#allocation0]]
  $region49: #{tpu_custom_call.1} parent=0
    _
  %s5 = ssub.s32 1, %s3
  %s6 = scalar_select 0, %s5, %s3
  $region1: #{tpu_custom_call.1} parent=0
    #allocation2 [shape = 'u8[4096]{0}', space=vmem, size = 0x1000, scoped, tag = 'input window, operand 0']
    #allocation3 [shape = 's32[2]{0}', space=sflag, size = 0x8, scoped, tag = 'scoped memory for tpu_custom_call.1']
    #allocation4 [shape = 's32[2]{0}', space=sflag, size = 0x8, scoped, tag = 'scoped memory for tpu_custom_call.1']
    #allocation5 [shape = 'u8[4096]{0}', space=vmem, size = 0x1000, scoped, tag = 'input window, operand 1']
    #allocation6 [shape = 's32[2]{0}', space=sflag, size = 0x8, scoped, tag = 'scoped memory for tpu_custom_call.1']
    #allocation7 [shape = 'u8[8192]{0}', space=vmem, size = 0x2000, scoped, tag = 'output window, operand 0']
    %7 = vsyncpa [#allocation3], 0
    %s8 = scalar_lea.sflag [#allocation3], 1
    %9 = vsyncpa %s8, 0
    %10 = vsyncpa [#allocation6], 0
    %s11 = scalar_lea.sflag [#allocation6], 1
    %12 = vsyncpa %s11, 0
    %13 = vsyncpa [#allocation4], 0
    %s14 = scalar_lea.sflag [#allocation4], 1
    %15 = vsyncpa %s14, 0
    loop: start=0, step=1, limit=6
    $region2: #{tpu_custom_call.1} parent=1 // loop_pre_header
      _
    $region3: #{tpu_custom_call.1} parent=1 // loop_header
      %s17 = sphi 0, %s21
      %p18 = scmp.ge.s32.totalorder %s17, 6
      %s27 = sphi 0, %s29
      %s30 = sphi 0, %s27
      %s31 = sphi 0, %s30
      %s47 = sphi 0, %s31
      %s53 = sphi 0, %s55
      %s56 = sphi 0, %s53
      %s57 = sphi 0, %s56
      %s73 = sphi 0, %s57
      %s79 = sphi 0, %s81
      %s82 = sphi 0, %s79
      %s83 = sphi 0, %s82
      %s99 = sphi 0, %s83
    $region4: #{tpu_custom_call.1} parent=1 // loop_header_branch
      %20 = sbr.rel (%p18) target = $region8
    $region5: #{tpu_custom_call.1} parent=1 // loop_body
      %s22 = ssub.s32 %s17, 1
      %s23 = ssub.s32 %s17, 2
      %s24 = sadd.s32 %s17, 1
      %s25 = ssub.s32 %s17, %s24
      %p26 = scmp.eq.s32.totalorder %s25, 0
      %s28 = sadd.s32 %s27, 1
      %s29 = scalar_select %p26, %s27, %s28
      %p32 = pneg %p26
      %p33 = scmp.eq.s32.totalorder %s17, 3
      %p34 = por %p32, %p33
      %p35 = scmp.ne.s32.totalorder %s27, %s30
      %p36 = scmp.eq.s32.totalorder %s17, 0
      %p37 = por %p35, %p36
      %p38 = scmp.ne.s32.totalorder %s27, %s30
      %p39 = scmp.eq.s32.totalorder %s22, 3
      %p40 = por %p38, %p39
      %p41 = scmp.ne.s32.totalorder %s30, %s31
      %p42 = scmp.eq.s32.totalorder %s22, 0
      %p43 = por %p41, %p42
      %p44 = scmp.ne.s32.totalorder %s30, %s31
      %p45 = scmp.eq.s32.totalorder %s23, 3
      %p46 = por %p44, %p45
      %p48 = scmp.ne.s32.totalorder %s31, %s47
      %p49 = scmp.eq.s32.totalorder %s23, 0
      %p50 = por %p48, %p49
      %s51 = ssub.s32 %s17, %s24
      %p52 = scmp.eq.s32.totalorder %s51, 0
      %s54 = sadd.s32 %s53, 1
      %s55 = scalar_select %p52, %s53, %s54
      %p58 = pneg %p52
      %p59 = scmp.eq.s32.totalorder %s17, 3
      %p60 = por %p58, %p59
      %p61 = scmp.ne.s32.totalorder %s53, %s56
      %p62 = scmp.eq.s32.totalorder %s17, 0
      %p63 = por %p61, %p62
      %p64 = scmp.ne.s32.totalorder %s53, %s56
      %p65 = scmp.eq.s32.totalorder %s22, 3
      %p66 = por %p64, %p65
      %p67 = scmp.ne.s32.totalorder %s56, %s57
      %p68 = scmp.eq.s32.totalorder %s22, 0
      %p69 = por %p67, %p68
      %p70 = scmp.ne.s32.totalorder %s56, %s57
      %p71 = scmp.eq.s32.totalorder %s23, 3
      %p72 = por %p70, %p71
      %p74 = scmp.ne.s32.totalorder %s57, %s73
      %p75 = scmp.eq.s32.totalorder %s23, 0
      %p76 = por %p74, %p75
      %s77 = ssub.s32 %s17, %s24
      %p78 = scmp.eq.s32.totalorder %s77, 0
      %s80 = sadd.s32 %s79, 1
      %s81 = scalar_select %p78, %s79, %s80
      %p84 = pneg %p78
      %p85 = scmp.eq.s32.totalorder %s17, 3
      %p86 = por %p84, %p85
      %p87 = scmp.ne.s32.totalorder %s79, %s82
      %p88 = scmp.eq.s32.totalorder %s17, 0
      %p89 = por %p87, %p88
      %p90 = scmp.ne.s32.totalorder %s79, %s82
      %p91 = scmp.eq.s32.totalorder %s22, 3
      %p92 = por %p90, %p91
      %p93 = scmp.ne.s32.totalorder %s82, %s83
      %p94 = scmp.eq.s32.totalorder %s22, 0
      %p95 = por %p93, %p94
      %p96 = scmp.ne.s32.totalorder %s82, %s83
      %p97 = scmp.eq.s32.totalorder %s23, 3
      %p98 = por %p96, %p97
      %p100 = scmp.ne.s32.totalorder %s83, %s99
      %p101 = scmp.eq.s32.totalorder %s23, 0
      %p102 = por %p100, %p101
      %p103 = scmp.le.s32.totalorder 1, %s17
      %p104 = scmp.lt.s32.totalorder %s17, 5
      %p105 = pnand %p103, %p104
      %p106 = pneg %p105
      // Predicated region
      $region9: #{tpu_custom_call.1} parent=5 // pred_check
        _
      $region10: #{tpu_custom_call.1} parent=5 // pred_check_branch
        %108 = sbr.rel (%p105) target = $region12
      $region11: #{tpu_custom_call.1} parent=5 // pred_region
        %s109 = ssub.s32 %s17, 1
      $region12: #{tpu_custom_call.1} parent=5 // pred_fallthru
        _
      %p110 = scmp.lt.s32.totalorder %s17, 4
      // Predicated region
      $region13: #{tpu_custom_call.1} parent=5 // pred_check
        %p111 = pneg %p110
      $region14: #{tpu_custom_call.1} parent=5 // pred_check_branch
        %113 = sbr.rel (%p111) target = $region16
      $region15: #{tpu_custom_call.1} parent=5 // pred_region
        // Predicated region
        $region17: #{tpu_custom_call.1} parent=15 // pred_check
          %p114 = pneg %p37
        $region18: #{tpu_custom_call.1} parent=15 // pred_check_branch
          %116 = sbr.rel (%p114) target = $region20
        $region19: #{tpu_custom_call.1} parent=15 // pred_region
          %s117 = sand.u32 %s27, 1
          %s118 = scalar_lea.sflag [#allocation3], %s117
          %s119 = sand.u32 %s27, 1
          %s120 = smul.addr %s119, 4
          %s121 = scalar_lea.vmem [#allocation2], %s120
          %s122 = smul.u32 2, %s17
          %s124 = ssub.s32 64, 64
          %125 = vsyncadd %s118, %s124
          %s126 = smul.addr %s122, 32
          %s127 = scalar_lea.hbm %s0, %s126
          %s129 = sshll.u32 %s121, 4
          %s130 = int_to_ptr.vmem [resolvable:$true] %s129
          %132 = dma.hbm_to_vmem [thread:$0]  %s127, 64, %s130, %s118
        $region20: #{tpu_custom_call.1} parent=15 // pred_fallthru
          _
        // Predicated region
        $region21: #{tpu_custom_call.1} parent=15 // pred_check
          %p133 = pneg %p63
        $region22: #{tpu_custom_call.1} parent=15 // pred_check_branch
          %135 = sbr.rel (%p133) target = $region24
        $region23: #{tpu_custom_call.1} parent=15 // pred_region
          %s136 = sand.u32 %s53, 1
          %s137 = scalar_lea.sflag [#allocation6], %s136
          %s138 = sand.u32 %s53, 1
          %s139 = smul.addr %s138, 4
          %s140 = scalar_lea.vmem [#allocation5], %s139
          %s141 = smul.u32 2, %s17
          %s143 = ssub.s32 64, 64
          %144 = vsyncadd %s137, %s143
          %s145 = smul.addr %s141, 32
          %s146 = scalar_lea.hbm %s1, %s145
          %s148 = sshll.u32 %s140, 4
          %s149 = int_to_ptr.vmem [resolvable:$true] %s148
          %151 = dma.hbm_to_vmem [thread:$0]  %s146, 64, %s149, %s137
        $region24: #{tpu_custom_call.1} parent=15 // pred_fallthru
          _
      $region16: #{tpu_custom_call.1} parent=5 // pred_fallthru
        _
      %p152 = scmp.le.s32.totalorder 1, %s17
      %p153 = scmp.lt.s32.totalorder %s17, 5
      %p154 = pnand %p152, %p153
      %p155 = pneg %p154
      // Predicated region
      $region25: #{tpu_custom_call.1} parent=5 // pred_check
        _
      $region26: #{tpu_custom_call.1} parent=5 // pred_check_branch
        %157 = sbr.rel (%p154) target = $region28
      $region27: #{tpu_custom_call.1} parent=5 // pred_region
        %s158 = ssub.s32 %s17, 1
        %s159 = sand.u32 %s30, 1
        %s160 = scalar_lea.sflag [#allocation3], %s159
        %s161 = sand.u32 %s30, 1
        %s162 = smul.addr %s161, 4
        %s163 = scalar_lea.vmem [#allocation2], %s162
        // Predicated region
        $region29: #{tpu_custom_call.1} parent=27 // pred_check
          %p164 = pneg %p43
        $region30: #{tpu_custom_call.1} parent=27 // pred_check_branch
          %166 = sbr.rel (%p164) target = $region32
        $region31: #{tpu_custom_call.1} parent=27 // pred_region
          %167 = dma.done %s160, 64
        $region32: #{tpu_custom_call.1} parent=27 // pred_fallthru
          _
        %s168 = sand.u32 %s56, 1
        %s169 = scalar_lea.sflag [#allocation6], %s168
        %s170 = sand.u32 %s56, 1
        %s171 = smul.addr %s170, 4
        %s172 = scalar_lea.vmem [#allocation5], %s171
        // Predicated region
        $region33: #{tpu_custom_call.1} parent=27 // pred_check
          %p173 = pneg %p69
        $region34: #{tpu_custom_call.1} parent=27 // pred_check_branch
          %175 = sbr.rel (%p173) target = $region36
        $region35: #{tpu_custom_call.1} parent=27 // pred_region
          %176 = dma.done %s169, 64
        $region36: #{tpu_custom_call.1} parent=27 // pred_fallthru
          _
        %s177 = sand.u32 %s30, 1
        %s178 = scalar_lea.sflag [#allocation3], %s177
        %s179 = sand.u32 %s30, 1
        %s180 = smul.addr %s179, 4
        %s181 = scalar_lea.vmem [#allocation2], %s180
        %p182 = pneg %p43
        %p183 = pneg %p40
        %s184 = sand.u32 %s56, 1
        %s185 = scalar_lea.sflag [#allocation6], %s184
        %s186 = sand.u32 %s56, 1
        %s187 = smul.addr %s186, 4
        %s188 = scalar_lea.vmem [#allocation5], %s187
        %p189 = pneg %p69
        %p190 = pneg %p66
        %p191 = pneg %p95
        %p192 = pneg %p92
        %s193 = sand.u32 %s82, 1
        %s194 = scalar_lea.sflag [#allocation4], %s193
        %s195 = sand.u32 %s82, 1
        %s196 = smul.addr %s195, 8
        %s197 = scalar_lea.vmem [#allocation7], %s196
        %s198 = smul.u32 2, %s22
        %s199 = smul.u32 2, %s22
        %s200 = smul.u32 2, %s22
        %v201 = vld [vmem:[%s163] sm:$0xf]
        %v202 = vld [vmem:[%s172] sm:$0xf]
        %v203 = vmul.f32 %v201, %v201
        %v206 = vunpack.c.l.s4 1983009808
        %v207 = vunpack.c.0.s8 %v206
        %v208 = vlaneseq
        %v209 = vshrl.u32 %v208, 7
        %v210 = vsub.s32 %v207, %v209
        %v211 = vrot.slane %v203, %v210
        %v212 = vcombine.high %v211, %v211
        %vm215 = vcmask 1041408
        %v216 = vsel %vm215, %v211, 0.0
        %v217 = vrot.slane %v216, 4
        %v218 = vadd.f32 %v216, %v217
        %v219 = vrot.slane %v218, 2
        %v220 = vadd.f32 %v218, %v219
        %v221 = vrot.slane %v220, 1
        %v222 = vadd.f32 %v220, %v221
        %v223 = vsel %vm215, %v212, 0.0
        %v224 = vrot.slane %v223, 4
        %v225 = vadd.f32 %v223, %v224
        %v226 = vrot.slane %v225, 2
        %v227 = vadd.f32 %v225, %v226
        %v228 = vrot.slane %v227, 1
        %v229 = vadd.f32 %v227, %v228
        %v230 = vmax.f32 %v222, 1e-24
        %v231 = vmax.f32 %v229, 1e-24
        %v232 = vrsqrt.pop %v230
        %v233 = vrsqrt.pop %v231
        %v234 = vmul.f32 %v202, %v202
        %v237 = vunpack.c.l.s4 1983009808
        %v238 = vunpack.c.0.s8 %v237
        %v239 = vlaneseq
        %v240 = vshrl.u32 %v239, 7
        %v241 = vsub.s32 %v238, %v240
        %v242 = vrot.slane %v234, %v241
        %v243 = vcombine.high %v242, %v242
        %v246 = vsel %vm215, %v242, 0.0
        %v247 = vrot.slane %v246, 4
        %v248 = vadd.f32 %v246, %v247
        %v249 = vrot.slane %v248, 2
        %v250 = vadd.f32 %v248, %v249
        %v251 = vrot.slane %v250, 1
        %v252 = vadd.f32 %v250, %v251
        %v253 = vsel %vm215, %v243, 0.0
        %v254 = vrot.slane %v253, 4
        %v255 = vadd.f32 %v253, %v254
        %v256 = vrot.slane %v255, 2
        %v257 = vadd.f32 %v255, %v256
        %v258 = vrot.slane %v257, 1
        %v259 = vadd.f32 %v257, %v258
        %v260 = vmax.f32 %v252, 1e-24
        %v261 = vmax.f32 %v259, 1e-24
        %v262 = vrsqrt.pop %v260
        %v263 = vrsqrt.pop %v261
        %v266 = vcombine.low %v232, %v233
        %v268 = vunpack.c.l.s4 1983009808
        %v269 = vunpack.c.0.s8 %v268
        %v270 = vlaneseq
        %v271 = vshrl.u32 %v270, 7
        %v272 = vsub.s32 %v269, %v271
        %v273 = vrot.slane %v266, %v272
        %v275 = vmul.f32 %v201, %v273
        %276 = vst [vmem:[%s197] sm:$0xf] %v275
        %v279 = vcombine.low %v262, %v263
        %v281 = vunpack.c.l.s4 1983009808
        %v282 = vunpack.c.0.s8 %v281
        %v283 = vlaneseq
        %v284 = vshrl.u32 %v283, 7
        %v285 = vsub.s32 %v282, %v284
        %v286 = vrot.slane %v279, %v285
        %v288 = vmul.f32 %v202, %v286
        %s289 = scalar_lea.vmem %s197, 4 [#allocation7]
        %290 = vst [vmem:[%s289] sm:$0xf] %v288
        %s291 = sand.u32 %s82, 1
        %s292 = scalar_lea.sflag [#allocation4], %s291
        %s293 = sand.u32 %s82, 1
        %s294 = smul.addr %s293, 8
        %s295 = scalar_lea.vmem [#allocation7], %s294
        // Predicated region
        $region37: #{tpu_custom_call.1} parent=27 // pred_check
          %p296 = pneg %p92
        $region38: #{tpu_custom_call.1} parent=27 // pred_check_branch
          %298 = sbr.rel (%p296) target = $region40
        $region39: #{tpu_custom_call.1} parent=27 // pred_region
          %s299 = smul.u32 2, %s22
          %s301 = ssub.s32 128, 128
          %302 = vsyncadd %s292, %s301
          %s303 = smul.addr %s299, 32
          %s304 = scalar_lea.hbm %s2, %s303
          %s305 = sshll.u32 %s295, 4
          %s306 = int_to_ptr.vmem [resolvable:$true] %s305
          %311 = dma.vmem_to_hbm [thread:$0]  %s306, 128, %s304, %s292, 64, 256, 4
        $region40: #{tpu_custom_call.1} parent=27 // pred_fallthru
          _
      $region28: #{tpu_custom_call.1} parent=5 // pred_fallthru
        _
      %p312 = scmp.le.s32.totalorder 2, %s17
      // Predicated region
      $region41: #{tpu_custom_call.1} parent=5 // pred_check
        %p313 = pneg %p312
      $region42: #{tpu_custom_call.1} parent=5 // pred_check_branch
        %315 = sbr.rel (%p313) target = $region44
      $region43: #{tpu_custom_call.1} parent=5 // pred_region
        %s316 = ssub.s32 %s17, 2
        // Predicated region
        $region45: #{tpu_custom_call.1} parent=43 // pred_check
          %p317 = pneg %p98
        $region46: #{tpu_custom_call.1} parent=43 // pred_check_branch
          %319 = sbr.rel (%p317) target = $region48
        $region47: #{tpu_custom_call.1} parent=43 // pred_region
          %s320 = sand.u32 %s83, 1
          %s321 = scalar_lea.sflag [#allocation4], %s320
          %s322 = sand.u32 %s83, 1
          %s323 = smul.addr %s322, 8
          %s324 = scalar_lea.vmem [#allocation7], %s323
          %325 = dma.done %s321, 128
        $region48: #{tpu_custom_call.1} parent=43 // pred_fallthru
          _
      $region44: #{tpu_custom_call.1} parent=5 // pred_fallthru
        _
    $region6: #{tpu_custom_call.1} parent=1 // loop_footer
      %s21 = sadd.s32 1, %s17
    $region7: #{tpu_custom_call.1} parent=1 // loop_footer_branch
      %16 = sbr.rel target = $region3
    $region8: #{tpu_custom_call.1} parent=1 // loop_exit
      _
    %326 = vsyncpa [#allocation3], 1
    %s327 = scalar_lea.sflag [#allocation3], 1
    %328 = vsyncpa %s327, 1
    %329 = vsyncpa [#allocation6], 1
    %s330 = scalar_lea.sflag [#allocation6], 1
    %331 = vsyncpa %s330, 1
    %332 = vsyncpa [#allocation4], 1
    %s333 = scalar_lea.sflag [#allocation4], 1
    %334 = vsyncpa %s333, 1

</llo_original>
